<compile_context>
chip_gen: v6e
topology: v6e:2x2x1
jax: 0.10.0
libtpu: 0.0.40
codegen_flags: <defaults>
</compile_context>

<pallas_src>
import functools

import jax
import jax.numpy as jnp
from jax.experimental import pallas as pl
from jax.experimental.pallas import tpu as pltpu


_TM_MAX = 512     # max batch rows per block
_TK_MAX = 8192    # max vocab elements per block


def _round_up(x, m):
    return (x + m - 1) // m * m


def _vmem_capacity_bytes():
    """Physical VMEM of the local chip; conservative (v7x) default on failure."""
    try:
        info = pltpu.get_tpu_info()
        cap = getattr(info, "vmem_capacity_bytes", None)
        if cap:
            return int(cap)
    except Exception:
        pass
    return 64 * 1024 * 1024


# ---------------------------------------------------------------------------
# Kernels
# ---------------------------------------------------------------------------
def _streamed_kernel(x_ref, w_ref, b_ref, o_ref, acc_ref):
    """Weight streamed per (batch block, vocab block).

    x_ref:   (tm, tk)      batch rows on sublanes, vocab tile on lanes
    w_ref:   (tk, C_pad)   pre-transposed weight tile (native MXU orientation)
    b_ref:   (1, C_pad)
    o_ref:   (tm, C_pad)
    acc_ref: (tm, C_pad)   f32 scratch, persistent across the vocab grid axis
    """
    k = pl.program_id(1)

    @pl.when(k == 0)
    def _():
        acc_ref[...] = jnp.zeros_like(acc_ref)

    x = x_ref[...]
    w = w_ref[...]
    if w.dtype != x.dtype:            # bf16-weight option: upcast in-register
        w = w.astype(x.dtype)
    acc_ref[...] += jnp.dot(x, w, preferred_element_type=jnp.float32)

    @pl.when(k == pl.num_programs(1) - 1)
    def _():
        o_ref[...] = (acc_ref[...] + b_ref[...]).astype(o_ref.dtype)


def _resident_kernel(x_ref, w_ref, b_ref, o_ref, acc_ref, *, tk):
    """Whole weight resident in VMEM (DMA'd exactly once for the whole grid).

    w_ref: (V_pad, C_pad); the k-th (tk, C_pad) chunk is sliced in VMEM.
    """
    k = pl.program_id(1)

    @pl.when(k == 0)
    def _():
        acc_ref[...] = jnp.zeros_like(acc_ref)

    off = pl.multiple_of(k * tk, tk)
    x = x_ref[...]
    w = w_ref[pl.ds(off, tk), :]
    if w.dtype != x.dtype:
        w = w.astype(x.dtype)
    acc_ref[...] += jnp.dot(x, w, preferred_element_type=jnp.float32)

    @pl.when(k == pl.num_programs(1) - 1)
    def _():
        o_ref[...] = (acc_ref[...] + b_ref[...]).astype(o_ref.dtype)


# ---------------------------------------------------------------------------
# Tiling plan + parameter prep
# ---------------------------------------------------------------------------
def _tile_plan(B, V, tm, tk):
    if tm is None:
        # >= 2 batch blocks when B allows (v7x dual-TensorCore), tm <= _TM_MAX,
        # and tm derived from B so padded rows stay small.
        nb = max(2 if B >= 16 else 1, pl.cdiv(B, _TM_MAX))
        tm = _round_up(pl.cdiv(B, nb), 8)
    nb = pl.cdiv(B, tm)
    B_pad = nb * tm

    if tk is None:
        nk = max(1, pl.cdiv(V, _TK_MAX))
        tk = _round_up(pl.cdiv(V, nk), 128)
    nk = pl.cdiv(V, tk)
    V_pad = nk * tk
    return tm, tk, nb, nk, B_pad, V_pad


def prepare_linear_params(weight, bias, *, V_pad, C_pad, weight_dtype=None):
    """One-time weight/bias prep: transpose to (V, C), pad, optional cast.

    In a real deployment this runs once at init and the prepared arrays are
    reused for every forward call (amortized).
    """
    C, V = weight.shape
    w_dtype = weight_dtype if weight_dtype is not None else weight.dtype
    w_t = weight.T.astype(w_dtype)                       # (V, C)
    if (V_pad, C_pad) != (V, C):
        w_p = jnp.zeros((V_pad, C_pad), w_dtype).at[:V, :C].set(w_t)
    else:
        w_p = w_t
    b_p = jnp.zeros((1, C_pad), jnp.float32).at[0, :C].set(
        bias.astype(jnp.float32))
    return w_p, b_p


# ---------------------------------------------------------------------------
# Wrapper
# ---------------------------------------------------------------------------
def bow_nn_classifier(x, weight, bias, *, weight_dtype=None, tm=None, tk=None,
                      weight_resident=None):
    """Forward pass of BoWNNClassifier: y = x @ weight.T + bias.

    x:      (B, V)  activations, streamed in their own dtype (no extra cast)
    weight: (C, V)  PyTorch nn.Linear layout
    bias:   (C,)
    returns (B, C) in x.dtype
    """
    B, V = x.shape
    C = weight.shape[0]
    C_pad = _round_up(C, 128)

    tm, tk, nb, nk, B_pad, V_pad = _tile_plan(B, V, tm, tk)

    # One-time parameter prep (amortized across calls in a real model).
    w_p, b_p = prepare_linear_params(weight, bias, V_pad=V_pad, C_pad=C_pad,
                                     weight_dtype=weight_dtype)
    x_itemsize = x.dtype.itemsize
    w_itemsize = w_p.dtype.itemsize
    o_itemsize = x_itemsize

    # Zero-pad x only when needed (zeros contribute exactly 0 to the dot).
    if (B_pad, V_pad) != (B, V):
        x_p = jnp.zeros((B_pad, V_pad), x.dtype).at[:B, :V].set(x)
    else:
        x_p = x

    # VMEM budget: pipeline double-buffers every non-constant block.
    streaming_bytes = (2 * tm * tk * x_itemsize        # x tiles
                       + 2 * tm * C_pad * o_itemsize   # output tiles
                       + tm * C_pad * 4                # f32 accumulator
                       + 2 * C_pad * 4)                # bias
    full_weight_bytes = 2 * V_pad * C_pad * w_itemsize  # resident (2 buffers)
    tile_weight_bytes = 2 * tk * C_pad * w_itemsize     # streamed per k

    if weight_resident is None:
        # Resident only if the whole (double-buffered) weight fits next to the
        # streaming buffers with headroom: true on v5e/v6e (128 MiB VMEM) for
        # large vocabs, false on v7x (64 MiB) once V gets big.
        weight_resident = (streaming_bytes + full_weight_bytes
                           + (8 << 20)) <= _vmem_capacity_bytes()
    # TODO(synk): pipeline_mode=pl.Buffered(1) on the grid-constant weight/bias
    # blocks would halve their VMEM cost and extend residency to larger vocabs.

    if weight_resident:
        kernel = functools.partial(_resident_kernel, tk=tk)
        w_spec = pl.BlockSpec((V_pad, C_pad), lambda i, k: (0, 0))
        weight_bytes = full_weight_bytes
    else:
        kernel = _streamed_kernel
        w_spec = pl.BlockSpec((tk, C_pad), lambda i, k: (k, 0))
        weight_bytes = tile_weight_bytes

    # Footprint-derived limit with ~20% + 4 MiB headroom for internal scratch,
    # floored at the scoped default and capped below v5e/v6e physical VMEM.
    vmem_limit = int((streaming_bytes + weight_bytes) * 1.2) + (4 << 20)
    vmem_limit = max(32 << 20, min(vmem_limit, 100 << 20))

    out_p = pl.pallas_call(
        kernel,
        out_shape=jax.ShapeDtypeStruct((B_pad, C_pad), x.dtype),
        grid_spec=pltpu.PrefetchScalarGridSpec(
            num_scalar_prefetch=0,
            grid=(nb, nk),                                   # reduction LAST
            in_specs=[
                pl.BlockSpec((tm, tk), lambda i, k: (i, k)),    # x tile
                w_spec,                                         # weight
                pl.BlockSpec((1, C_pad), lambda i, k: (0, 0)),  # bias (const)
            ],
            out_specs=pl.BlockSpec((tm, C_pad), lambda i, k: (i, 0)),
            scratch_shapes=[pltpu.VMEM((tm, C_pad), jnp.float32)],
        ),
        compiler_params=pltpu.CompilerParams(
            dimension_semantics=("parallel", "arbitrary"),
            vmem_limit_bytes=vmem_limit,
        ),
    )(x_p, w_p, b_p)

    # Strip padding (cheap XLA slice); dtype already matches x.
    return out_p[:B, :C]


if __name__ == "__main__":
    # Small shapes consistent with the module: bag-of-words features -> classes.
    batch = 4
    vocab_size = 32
    num_classes = 8

    key = jax.random.PRNGKey(0)
    kx, kw, kb = jax.random.split(key, 3)

    # Deterministic init mimicking nn.Linear default U(-1/sqrt(V), 1/sqrt(V)).
    bound = 1.0 / (vocab_size ** 0.5)
    weight = jax.random.uniform(kw, (num_classes, vocab_size),
                                minval=-bound, maxval=bound, dtype=jnp.float32)
    bias = jax.random.uniform(kb, (num_classes,),
                              minval=-bound, maxval=bound, dtype=jnp.float32)
    x = jax.random.uniform(kx, (batch, vocab_size), dtype=jnp.float32)

    ref = x @ weight.T + bias

    # Auto path (weight residency decided from the queried VMEM capacity).
    out = jax.block_until_ready(bow_nn_classifier(x, weight, bias))
    assert out.shape == (batch, num_classes)
    assert out.dtype == x.dtype
    assert jnp.allclose(out, ref, atol=1e-5, rtol=1e-5)

    # Force both kernel variants so each is exercised.
    out_res = jax.block_until_ready(
        bow_nn_classifier(x, weight, bias, weight_resident=True))
    assert jnp.allclose(out_res, ref, atol=1e-5, rtol=1e-5)

    out_str = jax.block_until_ready(
        bow_nn_classifier(x, weight, bias, weight_resident=False))
    assert jnp.allclose(out_str, ref, atol=1e-5, rtol=1e-5)

    # Optional bf16 weight stream (x stays f32, MXU accumulation f32) -- halves
    # weight HBM traffic at production vocab sizes; looser tolerance.
    out_bf16 = jax.block_until_ready(
        bow_nn_classifier(x, weight, bias, weight_dtype=jnp.bfloat16))
    assert jnp.allclose(out_bf16, ref, atol=2e-2, rtol=2e-2)

    # TODO(synk): int8 weight quantization path for v5e/v6e (int MXU) would
    # further halve weight traffic; not applicable on v7x (fp8-only MXU).

    print("KERNEL_OK")
</pallas_src>

<mosaic_0001>
module attributes {stable_mosaic.version = 11 : i64} {
  func.func @_resident_kernel(%arg0: i32, %arg1: i32, %arg2: memref<8x128xf32, #tpu.memory_space<vmem>>, %arg3: memref<128x128xf32, #tpu.memory_space<vmem>>, %arg4: memref<1x128xf32, #tpu.memory_space<vmem>>, %arg5: memref<8x128xf32, #tpu.memory_space<vmem>>, %arg6: memref<8x128xf32, #tpu.memory_space<vmem>>) attributes {dimension_semantics = [#tpu.dimension_semantics<parallel>, #tpu.dimension_semantics<arbitrary>], iteration_bounds = array<i64: 1, 1>, scalar_prefetch = 0 : i64, scratch_operands = 1 : i64, tpu.core_type = #tpu.core_type<tc>, window_params = [{transform_indices = @transform_0, window_bounds = array<i64: 8, 128>}, {pipeline_mode = #tpu.pipeline_mode<synchronous>, transform_indices = @transform_1, window_bounds = array<i64: 128, 128>}, {pipeline_mode = #tpu.pipeline_mode<synchronous>, transform_indices = @transform_2, window_bounds = array<i64: 1, 128>}, {transform_indices = @transform_3, window_bounds = array<i64: 8, 128>}]} {
    %c0_i32 = arith.constant 0 : i32
    %0 = arith.cmpi eq, %arg1, %c0_i32 : i32
    %1 = arith.extui %0 : i1 to i32
    %c0_i32_0 = arith.constant 0 : i32
    %2 = arith.cmpi ne, %1, %c0_i32_0 : i32
    scf.if %2 {
      %cst_9 = arith.constant 0.000000e+00 : f32
      %15 = vector.broadcast %cst_9 : f32 to vector<8x128xf32>
      %c0_10 = arith.constant 0 : index
      %c0_11 = arith.constant 0 : index
      %16 = vector.load %arg6[%c0_10, %c0_11] : memref<8x128xf32, #tpu.memory_space<vmem>>, vector<8x128xf32>
      tpu.vector_store %arg6[%c0_10, %c0_11], %15 {strides = array<i32>} : memref<8x128xf32, #tpu.memory_space<vmem>>, vector<8x128xf32>,
    } else {
    }
    %c128_i32 = arith.constant 128 : i32
    %3 = arith.muli %arg1, %c128_i32 : i32
    %4 = tpu.assume_multiple %3, 128 : i32
    %c0 = arith.constant 0 : index
    %c0_1 = arith.constant 0 : index
    %5 = vector.load %arg2[%c0, %c0_1] : memref<8x128xf32, #tpu.memory_space<vmem>>, vector<8x128xf32>
    %6 = arith.index_cast %4 : i32 to index
    %c0_2 = arith.constant 0 : index
    %7 = vector.load %arg3[%6, %c0_2] : memref<128x128xf32, #tpu.memory_space<vmem>>, vector<128x128xf32>
    %c0_3 = arith.constant 0 : index
    %c0_4 = arith.constant 0 : index
    %8 = vector.load %arg6[%c0_3, %c0_4] : memref<8x128xf32, #tpu.memory_space<vmem>>, vector<8x128xf32>
    %cst = arith.constant dense<0.000000e+00> : vector<8x128xf32>
    %9 = tpu.matmul %5, %7, %cst {dimension_numbers = #tpu.dot_dimension_numbers<[1], [0], [0], [1], [0, 0, 1, 1], [], []>} : vector<8x128xf32>, vector<128x128xf32>, vector<8x128xf32> -> vector<8x128xf32>
    %10 = arith.addf %8, %9 : vector<8x128xf32>
    %c0_5 = arith.constant 0 : index
    %c0_6 = arith.constant 0 : index
    %11 = vector.load %arg6[%c0_5, %c0_6] : memref<8x128xf32, #tpu.memory_space<vmem>>, vector<8x128xf32>
    tpu.vector_store %arg6[%c0_5, %c0_6], %10 {strides = array<i32>} : memref<8x128xf32, #tpu.memory_space<vmem>>, vector<8x128xf32>,
    %c0_i32_7 = arith.constant 0 : i32
    %12 = arith.cmpi eq, %arg1, %c0_i32_7 : i32
    %13 = arith.extui %12 : i1 to i32
    %c0_i32_8 = arith.constant 0 : i32
    %14 = arith.cmpi ne, %13, %c0_i32_8 : i32
    scf.if %14 {
      %c0_9 = arith.constant 0 : index
      %c0_10 = arith.constant 0 : index
      %15 = vector.load %arg6[%c0_9, %c0_10] : memref<8x128xf32, #tpu.memory_space<vmem>>, vector<8x128xf32>
      %c0_11 = arith.constant 0 : index
      %c0_12 = arith.constant 0 : index
      %16 = vector.load %arg4[%c0_11, %c0_12] : memref<1x128xf32, #tpu.memory_space<vmem>>, vector<1x128xf32>
      %17 = vector.broadcast %16 : vector<1x128xf32> to vector<8x128xf32>
      %18 = arith.addf %15, %17 : vector<8x128xf32>
      %c0_13 = arith.constant 0 : index
      %c0_14 = arith.constant 0 : index
      %19 = vector.load %arg5[%c0_13, %c0_14] : memref<8x128xf32, #tpu.memory_space<vmem>>, vector<8x128xf32>
      tpu.vector_store %arg5[%c0_13, %c0_14], %18 {strides = array<i32>} : memref<8x128xf32, #tpu.memory_space<vmem>>, vector<8x128xf32>,
    } else {
    }
    return
  }
  func.func @transform_0(%arg0: i32, %arg1: i32) -> (i32, i32) {
    %c0_i32 = arith.constant 0 : i32
    return %arg0, %arg1 : i32, i32
  }
  func.func @transform_1(%arg0: i32, %arg1: i32) -> (i32, i32) {
    %c0_i32 = arith.constant 0 : i32
    %c0_i32_0 = arith.constant 0 : i32
    %c0_i32_1 = arith.constant 0 : i32
    return %c0_i32, %c0_i32_0 : i32, i32
  }
  func.func @transform_2(%arg0: i32, %arg1: i32) -> (i32, i32) {
    %c0_i32 = arith.constant 0 : i32
    %c0_i32_0 = arith.constant 0 : i32
    %c0_i32_1 = arith.constant 0 : i32
    return %c0_i32, %c0_i32_0 : i32, i32
  }
  func.func @transform_3(%arg0: i32, %arg1: i32) -> (i32, i32) {
    %c0_i32 = arith.constant 0 : i32
    %c0_i32_0 = arith.constant 0 : i32
    return %arg0, %c0_i32 : i32, i32
  }
}

</mosaic_0001>

<llo_original>
// kernel: tpu_custom_call.1
$region0: #{tpu_custom_call.1}
  #allocation0 [shape = 'u32[]', space=smem, size = 0x4, offset = 0x4, fixed_abs, tag = 'smem constant byte address 0x4 - core index']
  #allocation1 [shape = 'u32[144,128]{1,0:T(1,128)}', space=vmem, size = 0x12000, scoped, tag = 'internal scratch']
  #allocation2 [shape = 'f32[8,128]{1,0:T(8,128)}', space=vmem, size = 0x1000, scoped, tag = 'scratch operand']
  %s0 = inlined_call_operand.hbm [shape: f32[8,128], index: 0, kind: input, shape index: {}]
  %s1 = inlined_call_operand.hbm [shape: f32[128,128], index: 1, kind: input, shape index: {}]
  %s2 = inlined_call_operand.vmem [shape: f32[1,128], index: 2, kind: input, shape index: {}]
  %s3 = inlined_call_operand.hbm [shape: f32[8,128], index: 3, kind: output, shape index: {}]
  %s4 = sld [smem:[#allocation0]]
  $region38: #{tpu_custom_call.1} parent=0
    _
  %s6 = ssub.s32 1, %s4
  %s7 = scalar_select 0, %s6, %s4
  $region1: #{tpu_custom_call.1} parent=0
    #allocation3 [shape = 'u8[4096]{0}', space=vmem, size = 0x1000, scoped, tag = 'input window, operand 0, single buffered']
    #allocation4 [shape = 's32[1]{0}', space=sflag, size = 0x4, scoped, tag = 'scoped memory for tpu_custom_call.1']
    #allocation5 [shape = 's32[1]{0}', space=sflag, size = 0x4, scoped, tag = 'scoped memory for tpu_custom_call.1']
    #allocation6 [shape = 'u8[65536]{0}', space=vmem, size = 0x10000, scoped, tag = 'input window, operand 1, single buffered']
    #allocation7 [shape = 's32[1]{0}', space=sflag, size = 0x4, scoped, tag = 'scoped memory for tpu_custom_call.1']
    #allocation8 [shape = 'u8[4096]{0}', space=vmem, size = 0x1000, scoped, tag = 'output window, operand 0, single buffered']
    %8 = vsyncpa [#allocation4], 0
    %9 = vsyncpa [#allocation7], 0
    %10 = vsyncpa [#allocation5], 0
    // Predicated region
    $region2: #{tpu_custom_call.1} parent=1 // pred_check
      _
    $region3: #{tpu_custom_call.1} parent=1 // pred_check_branch
      %12 = sbr.rel (0) target = $region5
    $region4: #{tpu_custom_call.1} parent=1 // pred_region
      %s14 = ssub.s32 128, 128
      %15 = vsyncadd [#allocation4], %s14
      %s17 = sshll.u32 [#allocation3], 4
      %s18 = int_to_ptr.vmem [resolvable:$true] %s17
      %20 = dma.hbm_to_vmem [thread:$0]  %s0, 128, %s18, [#allocation4]
    $region5: #{tpu_custom_call.1} parent=1 // pred_fallthru
      _
    // Predicated region
    $region6: #{tpu_custom_call.1} parent=1 // pred_check
      _
    $region7: #{tpu_custom_call.1} parent=1 // pred_check_branch
      %22 = sbr.rel (0) target = $region9
    $region8: #{tpu_custom_call.1} parent=1 // pred_region
      %s24 = ssub.s32 2048, 2048
      %25 = vsyncadd [#allocation7], %s24
      %s26 = sshll.u32 [#allocation6], 4
      %s27 = int_to_ptr.vmem [resolvable:$true] %s26
      %32 = dma.hbm_to_vmem [thread:$0]  %s1, 2048, %s27, [#allocation7], 128, 128, 8
    $region9: #{tpu_custom_call.1} parent=1 // pred_fallthru
      _
    // Predicated region
    $region10: #{tpu_custom_call.1} parent=1 // pred_check
      _
    $region11: #{tpu_custom_call.1} parent=1 // pred_check_branch
      %34 = sbr.rel (0) target = $region13
    $region12: #{tpu_custom_call.1} parent=1 // pred_region
      _
    $region13: #{tpu_custom_call.1} parent=1 // pred_fallthru
      _
    // Predicated region
    $region14: #{tpu_custom_call.1} parent=1 // pred_check
      _
    $region15: #{tpu_custom_call.1} parent=1 // pred_check_branch
      %36 = sbr.rel (0) target = $region17
    $region16: #{tpu_custom_call.1} parent=1 // pred_region
      %37 = dma.done [#allocation4], 128
    $region17: #{tpu_custom_call.1} parent=1 // pred_fallthru
      _
    // Predicated region
    $region18: #{tpu_custom_call.1} parent=1 // pred_check
      _
    $region19: #{tpu_custom_call.1} parent=1 // pred_check_branch
      %39 = sbr.rel (0) target = $region21
    $region20: #{tpu_custom_call.1} parent=1 // pred_region
      %40 = dma.done [#allocation7], 2048
    $region21: #{tpu_custom_call.1} parent=1 // pred_fallthru
      _
    %p41 = scmp.eq.s32.totalorder 0, 0
    // Predicated region
    $region22: #{tpu_custom_call.1} parent=1 // pred_check
      %p42 = pneg %p41
    $region23: #{tpu_custom_call.1} parent=1 // pred_check_branch
      %44 = sbr.rel (%p42) target = $region25
    $region24: #{tpu_custom_call.1} parent=1 // pred_region
      %45 = vst [vmem:[#allocation2] sm:$0xff] 0.0
    $region25: #{tpu_custom_call.1} parent=1 // pred_fallthru
      _
    %s46 = smul.u32 0, 128
    %v47 = vld [vmem:[#allocation3] sm:$0xff]
    %s48 = scalar_lea.vmem [#allocation6], %s46
    %v49 = vld [vmem:[%s48] sm:$0xff]
    %v50 = vld [vmem:[%s48 + $0x8] sm:$0xff]
    %v51 = vld [vmem:[%s48 + $0x10] sm:$0xff]
    %v52 = vld [vmem:[%s48 + $0x18] sm:$0xff]
    %v53 = vld [vmem:[%s48 + $0x20] sm:$0xff]
    %v54 = vld [vmem:[%s48 + $0x28] sm:$0xff]
    %v55 = vld [vmem:[%s48 + $0x30] sm:$0xff]
    %v56 = vld [vmem:[%s48 + $0x38] sm:$0xff]
    %v57 = vld [vmem:[%s48 + $0x40] sm:$0xff]
    %v58 = vld [vmem:[%s48 + $0x48] sm:$0xff]
    %v59 = vld [vmem:[%s48 + $0x50] sm:$0xff]
    %v60 = vld [vmem:[%s48 + $0x58] sm:$0xff]
    %v61 = vld [vmem:[%s48 + $0x60] sm:$0xff]
    %v62 = vld [vmem:[%s48 + $0x68] sm:$0xff]
    %v63 = vld [vmem:[%s48 + $0x70] sm:$0xff]
    %v64 = vld [vmem:[%s48 + $0x78] sm:$0xff]
    %v65 = vld [vmem:[#allocation2] sm:$0xff]
    %66 = vmatprep.subr.mxu0 0.0
    %67 = vmatpush1.msra.mxu0 %v64
    %68 = vmatprep.subr.mxu0 0.0
    %69 = vmatpush1.msra.mxu0 %v63
    %70 = vmatprep.subr.mxu0 0.0
    %71 = vmatpush1.msra.mxu0 %v62
    %72 = vmatprep.subr.mxu0 0.0
    %73 = vmatpush1.msra.mxu0 %v61
    %74 = vmatprep.subr.mxu0 0.0
    %75 = vmatpush1.msra.mxu0 %v60
    %76 = vmatprep.subr.mxu0 0.0
    %77 = vmatpush1.msra.mxu0 %v59
    %78 = vmatprep.subr.mxu0 0.0
    %79 = vmatpush1.msra.mxu0 %v58
    %80 = vmatprep.subr.mxu0 0.0
    %81 = vmatpush1.msra.mxu0 %v57
    %82 = vmatprep.subr.mxu0 0.0
    %83 = vmatpush1.msra.mxu0 %v56
    %84 = vmatprep.subr.mxu0 0.0
    %85 = vmatpush1.msra.mxu0 %v55
    %86 = vmatprep.subr.mxu0 0.0
    %87 = vmatpush1.msra.mxu0 %v54
    %88 = vmatprep.subr.mxu0 0.0
    %89 = vmatpush1.msra.mxu0 %v53
    %90 = vmatprep.subr.mxu0 0.0
    %91 = vmatpush1.msra.mxu0 %v52
    %92 = vmatprep.subr.mxu0 0.0
    %93 = vmatpush1.msra.mxu0 %v51
    %94 = vmatprep.subr.mxu0 0.0
    %95 = vmatpush1.msra.mxu0 %v50
    %96 = vmatprep.subr.mxu0 0.0
    %97 = vmatpush1.msra.mxu0 %v49
    %98 = vmatprep.subr.mxu0 0.0
    %99 = vmatpush2.msra.mxu0 0.0
    %100 = vmatprep.subr.mxu0 0.0
    %101 = vmatpush2.msra.mxu0 0.0
    %102 = vmatprep.subr.mxu0 0.0
    %103 = vmatpush2.msra.mxu0 0.0
    %104 = vmatprep.subr.mxu0 0.0
    %105 = vmatpush2.msra.mxu0 0.0
    %106 = vmatprep.subr.mxu0 0.0
    %107 = vmatpush2.msra.mxu0 0.0
    %108 = vmatprep.subr.mxu0 0.0
    %109 = vmatpush2.msra.mxu0 0.0
    %110 = vmatprep.subr.mxu0 0.0
    %111 = vmatpush2.msra.mxu0 0.0
    %112 = vmatprep.subr.mxu0 0.0
    %113 = vmatpush2.msra.mxu0 0.0
    %114 = vmatprep.subr.mxu0 0.0
    %115 = vmatpush2.msra.mxu0 0.0
    %116 = vmatprep.subr.mxu0 0.0
    %117 = vmatpush2.msra.mxu0 0.0
    %118 = vmatprep.subr.mxu0 0.0
    %119 = vmatpush2.msra.mxu0 0.0
    %120 = vmatprep.subr.mxu0 0.0
    %121 = vmatpush2.msra.mxu0 0.0
    %122 = vmatprep.subr.mxu0 0.0
    %123 = vmatpush2.msra.mxu0 0.0
    %124 = vmatprep.subr.mxu0 0.0
    %125 = vmatpush2.msra.mxu0 0.0
    %126 = vmatprep.subr.mxu0 0.0
    %127 = vmatpush2.msra.mxu0 0.0
    %128 = vmatprep.subr.mxu0 0.0
    %129 = vmatpush2.msra.mxu0 0.0
    %130 = vmatprep.mubr.f32.mxu0 0.0
    %131 = vmatmul.mubr.f32.gmra.mxu0 %v47
    %v132 = vpop.f32.mrf.mxu0
    %v133 = vadd.f32 0.0, %v132
    %v134 = vpop.f32.mrf.mxu0
    %135 = vdwg.mxu0
    %v136 = vadd.f32 %v65, %v133
    %137 = vst [vmem:[#allocation2] sm:$0xff] %v136
    // Predicated region
    $region26: #{tpu_custom_call.1} parent=1 // pred_check
      %p138 = pneg %p41
    $region27: #{tpu_custom_call.1} parent=1 // pred_check_branch
      %140 = sbr.rel (%p138) target = $region29
    $region28: #{tpu_custom_call.1} parent=1 // pred_region
      %v141 = vld [vmem:[#allocation2] sm:$0xff]
      %v142 = vld [vmem:[%s2] sm:$0x1]
      %v144 = vlaneseq
      %v145 = vshrl.u32 %v144, 7
      %v146 = vsub.s32 0, %v145
      %v147 = vrot.slane %v142, %v146
      %v149 = vadd.f32 %v141, %v147
      %150 = vst [vmem:[#allocation8] sm:$0xff] %v149
    $region29: #{tpu_custom_call.1} parent=1 // pred_fallthru
      _
    // Predicated region
    $region30: #{tpu_custom_call.1} parent=1 // pred_check
      _
    $region31: #{tpu_custom_call.1} parent=1 // pred_check_branch
      %152 = sbr.rel (0) target = $region33
    $region32: #{tpu_custom_call.1} parent=1 // pred_region
      %s154 = ssub.s32 128, 128
      %155 = vsyncadd [#allocation5], %s154
      %s157 = sshll.u32 [#allocation8], 4
      %s158 = int_to_ptr.vmem [resolvable:$true] %s157
      %160 = dma.vmem_to_hbm [thread:$0]  %s158, 128, %s3, [#allocation5]
    $region33: #{tpu_custom_call.1} parent=1 // pred_fallthru
      _
    // Predicated region
    $region34: #{tpu_custom_call.1} parent=1 // pred_check
      _
    $region35: #{tpu_custom_call.1} parent=1 // pred_check_branch
      %162 = sbr.rel (0) target = $region37
    $region36: #{tpu_custom_call.1} parent=1 // pred_region
      %163 = dma.done [#allocation5], 128
    $region37: #{tpu_custom_call.1} parent=1 // pred_fallthru
      _
    %164 = vsyncpa [#allocation4], 1
    %165 = vsyncpa [#allocation7], 1
    %166 = vsyncpa [#allocation5], 1

</llo_original>
